<compile_context>
chip_gen: v7x
topology: tpu7x:2x2x1
jax: 0.10.0
libtpu: 0.0.40
codegen_flags: <defaults>
</compile_context>

<pallas_src>
import functools

import jax
import jax.numpy as jnp
from jax.experimental import pallas as pl
from jax.experimental.pallas import tpu as pltpu


STATE_SIZE = 4      # CartPole-v1 observation dim
ACTION_SIZE = 2     # CartPole-v1 action dim
HIDDEN = 64

F_PAD = 8           # state dim padded to f32 sublane width
H_PAD = 128         # hidden dim padded to lane width
O_PAD = 8           # output dim padded to 8 (block dim == full array dim)


def _round_up(n, m):
    return ((n + m - 1) // m) * m


def _qnet_kernel(x_ref, w1_ref, b1_ref, w2_ref, b2_ref, w3_ref, b3_ref, o_ref):
    x = x_ref[...]                                               # (TB, F_PAD)

    # fc1 on the MXU: single (TB,8)x(8,128) pass; bias add fused into relu.
    # Padded x columns / w1 rows are zero, padded b1 lanes are zero, so the
    # padded h1 lanes are exactly relu(0) = 0.
    h1 = jnp.maximum(
        jnp.dot(x, w1_ref[...], preferred_element_type=jnp.float32) + b1_ref[...],
        0.0)

    # fc2 + relu on the MXU (128x128, lane-dense).
    h2 = jnp.maximum(
        jnp.dot(h1, w2_ref[...], preferred_element_type=jnp.float32) + b2_ref[...],
        0.0)

    # fc3 (linear).  Output is only 8 lanes wide -> 16x fewer HBM write bytes
    # than a 128-lane output; masked vst cost is dwarfed by the DMA savings.
    out = jnp.dot(h2, w3_ref[...], preferred_element_type=jnp.float32) + b3_ref[...]
    o_ref[...] = out.astype(o_ref.dtype)


def pad_params(params):
    """Zero-pad PyTorch-shaped params to TPU-friendly shapes (do this once)."""
    w1, b1 = params["w1"], params["b1"]   # (4,64), (1,64)
    w2, b2 = params["w2"], params["b2"]   # (64,64), (1,64)
    w3, b3 = params["w3"], params["b3"]   # (64,2), (1,2)
    return {
        "w1": jnp.pad(w1, ((0, F_PAD - w1.shape[0]), (0, H_PAD - w1.shape[1]))),
        "b1": jnp.pad(b1, ((0, 0), (0, H_PAD - b1.shape[1]))),
        "w2": jnp.pad(w2, ((0, H_PAD - w2.shape[0]), (0, H_PAD - w2.shape[1]))),
        "b2": jnp.pad(b2, ((0, 0), (0, H_PAD - b2.shape[1]))),
        "w3": jnp.pad(w3, ((0, H_PAD - w3.shape[0]), (0, O_PAD - w3.shape[1]))),
        "b3": jnp.pad(b3, ((0, 0), (0, O_PAD - b3.shape[1]))),
    }


def _choose_tiling(batch, tb):
    """Balanced batch tiling: padding waste < 1 tile; >=2 grid steps when
    there is enough work so v7x megacore uses both TensorCores."""
    b8 = _round_up(max(batch, 1), 8)
    n_tiles = max(pl.cdiv(b8, tb), 1)
    if n_tiles == 1 and b8 >= 512:
        n_tiles = 2
    tile = _round_up(pl.cdiv(b8, n_tiles), 8)
    b_pad = n_tiles * tile
    return tile, b_pad


@functools.partial(jax.jit, static_argnames=("tb",))
def qnetwork_forward(x, padded_params, *, tb=1024):
    """x: (B, STATE_SIZE) f32.  padded_params: output of pad_params()."""
    B = x.shape[0]
    tile, b_pad = _choose_tiling(B, tb)
    x_p = jnp.pad(x, ((0, b_pad - B), (0, F_PAD - STATE_SIZE)))

    w1, b1 = padded_params["w1"], padded_params["b1"]
    w2, b2 = padded_params["w2"], padded_params["b2"]
    w3, b3 = padded_params["w3"], padded_params["b3"]

    # Resident operands: constant block index -> DMA'd once, reused each step.
    resident = lambda shape: pl.BlockSpec(shape, lambda i: (0, 0))

    out_pad = pl.pallas_call(
        _qnet_kernel,
        out_shape=jax.ShapeDtypeStruct((b_pad, O_PAD), jnp.float32),
        grid=(pl.cdiv(b_pad, tile),),
        in_specs=[
            pl.BlockSpec((tile, F_PAD), lambda i: (i, 0)),   # x: tiled over batch
            resident((F_PAD, H_PAD)), resident((1, H_PAD)),  # w1, b1
            resident((H_PAD, H_PAD)), resident((1, H_PAD)),  # w2, b2
            resident((H_PAD, O_PAD)), resident((1, O_PAD)),  # w3, b3
        ],
        out_specs=pl.BlockSpec((tile, O_PAD), lambda i: (i, 0)),
        compiler_params=pltpu.CompilerParams(
            dimension_semantics=("parallel",),               # megacore on v7x
        ),
    )(x_p, w1, b1, w2, b2, w3, b3)

    # NOTE: never argmax the padded output directly — pad columns are 0 and
    # would beat negative real Q-values.  Always slice (or mask) first.
    return out_pad[:B, :ACTION_SIZE]


def init_params(key):
    """Deterministic init mimicking PyTorch Linear (U(-1/sqrt(fan_in), +))."""
    def linear(key, fan_in, fan_out):
        kw, kb = jax.random.split(key)
        bound = 1.0 / jnp.sqrt(jnp.float32(fan_in))
        w = jax.random.uniform(kw, (fan_in, fan_out), jnp.float32, -bound, bound)
        b = jax.random.uniform(kb, (1, fan_out), jnp.float32, -bound, bound)
        return w, b

    k1, k2, k3 = jax.random.split(key, 3)
    w1, b1 = linear(k1, STATE_SIZE, HIDDEN)
    w2, b2 = linear(k2, HIDDEN, HIDDEN)
    w3, b3 = linear(k3, HIDDEN, ACTION_SIZE)
    return {"w1": w1, "b1": b1, "w2": w2, "b2": b2, "w3": w3, "b3": b3}


def _reference(x, p):
    h1 = jnp.maximum(x @ p["w1"] + p["b1"], 0.0)
    h2 = jnp.maximum(h1 @ p["w2"] + p["b2"], 0.0)
    return h2 @ p["w3"] + p["b3"]


if __name__ == "__main__":
    key = jax.random.PRNGKey(0)
    kx, kp = jax.random.split(key)

    B = 8
    x = jax.random.normal(kx, (B, STATE_SIZE), jnp.float32)
    params = init_params(kp)
    padded = pad_params(params)          # one-time, wrapper-side padding

    out = qnetwork_forward(x, padded)
    out = jax.block_until_ready(out)

    ref = _reference(x, params)
    assert out.shape == (B, ACTION_SIZE), out.shape
    assert jnp.allclose(out, ref, atol=1e-5, rtol=1e-5), "mismatch vs reference"

    print("KERNEL_OK")
</pallas_src>

<mosaic_0001>
module attributes {stable_mosaic.version = 11 : i64} {
  func.func @_qnet_kernel(%arg0: i32, %arg1: memref<8x8xf32, #tpu.memory_space<vmem>>, %arg2: memref<8x128xf32, #tpu.memory_space<vmem>>, %arg3: memref<1x128xf32, #tpu.memory_space<vmem>>, %arg4: memref<128x128xf32, #tpu.memory_space<vmem>>, %arg5: memref<1x128xf32, #tpu.memory_space<vmem>>, %arg6: memref<128x8xf32, #tpu.memory_space<vmem>>, %arg7: memref<1x8xf32, #tpu.memory_space<vmem>>, %arg8: memref<8x8xf32, #tpu.memory_space<vmem>>) attributes {dimension_semantics = [#tpu.dimension_semantics<parallel>], iteration_bounds = array<i64: 1>, scalar_prefetch = 0 : i64, scratch_operands = 0 : i64, tpu.core_type = #tpu.core_type<tc>, window_params = [{transform_indices = @transform_0, window_bounds = array<i64: 8, 8>}, {pipeline_mode = #tpu.pipeline_mode<synchronous>, transform_indices = @transform_1, window_bounds = array<i64: 8, 128>}, {pipeline_mode = #tpu.pipeline_mode<synchronous>, transform_indices = @transform_2, window_bounds = array<i64: 1, 128>}, {pipeline_mode = #tpu.pipeline_mode<synchronous>, transform_indices = @transform_3, window_bounds = array<i64: 128, 128>}, {pipeline_mode = #tpu.pipeline_mode<synchronous>, transform_indices = @transform_4, window_bounds = array<i64: 1, 128>}, {pipeline_mode = #tpu.pipeline_mode<synchronous>, transform_indices = @transform_5, window_bounds = array<i64: 128, 8>}, {pipeline_mode = #tpu.pipeline_mode<synchronous>, transform_indices = @transform_6, window_bounds = array<i64: 1, 8>}, {transform_indices = @transform_7, window_bounds = array<i64: 8, 8>}]} {
    %c0 = arith.constant 0 : index
    %c0_0 = arith.constant 0 : index
    %0 = vector.load %arg1[%c0, %c0_0] : memref<8x8xf32, #tpu.memory_space<vmem>>, vector<8x8xf32>
    %c0_1 = arith.constant 0 : index
    %c0_2 = arith.constant 0 : index
    %1 = vector.load %arg2[%c0_1, %c0_2] : memref<8x128xf32, #tpu.memory_space<vmem>>, vector<8x128xf32>
    %cst = arith.constant dense<0.000000e+00> : vector<8x128xf32>
    %2 = tpu.matmul %0, %1, %cst {dimension_numbers = #tpu.dot_dimension_numbers<[1], [0], [0], [1], [0, 0, 1, 1], [], []>} : vector<8x8xf32>, vector<8x128xf32>, vector<8x128xf32> -> vector<8x128xf32>
    %c0_3 = arith.constant 0 : index
    %c0_4 = arith.constant 0 : index
    %3 = vector.load %arg3[%c0_3, %c0_4] : memref<1x128xf32, #tpu.memory_space<vmem>>, vector<1x128xf32>
    %4 = vector.broadcast %3 : vector<1x128xf32> to vector<8x128xf32>
    %5 = arith.addf %2, %4 : vector<8x128xf32>
    %cst_5 = arith.constant 0.000000e+00 : f32
    %6 = vector.broadcast %cst_5 : f32 to vector<8x128xf32>
    %7 = arith.maximumf %5, %6 : vector<8x128xf32>
    %c0_6 = arith.constant 0 : index
    %c0_7 = arith.constant 0 : index
    %8 = vector.load %arg4[%c0_6, %c0_7] : memref<128x128xf32, #tpu.memory_space<vmem>>, vector<128x128xf32>
    %cst_8 = arith.constant dense<0.000000e+00> : vector<8x128xf32>
    %9 = tpu.matmul %7, %8, %cst_8 {dimension_numbers = #tpu.dot_dimension_numbers<[1], [0], [0], [1], [0, 0, 1, 1], [], []>} : vector<8x128xf32>, vector<128x128xf32>, vector<8x128xf32> -> vector<8x128xf32>
    %c0_9 = arith.constant 0 : index
    %c0_10 = arith.constant 0 : index
    %10 = vector.load %arg5[%c0_9, %c0_10] : memref<1x128xf32, #tpu.memory_space<vmem>>, vector<1x128xf32>
    %11 = vector.broadcast %10 : vector<1x128xf32> to vector<8x128xf32>
    %12 = arith.addf %9, %11 : vector<8x128xf32>
    %cst_11 = arith.constant 0.000000e+00 : f32
    %13 = vector.broadcast %cst_11 : f32 to vector<8x128xf32>
    %14 = arith.maximumf %12, %13 : vector<8x128xf32>
    %c0_12 = arith.constant 0 : index
    %c0_13 = arith.constant 0 : index
    %15 = vector.load %arg6[%c0_12, %c0_13] : memref<128x8xf32, #tpu.memory_space<vmem>>, vector<128x8xf32>
    %cst_14 = arith.constant dense<0.000000e+00> : vector<8x8xf32>
    %16 = tpu.matmul %14, %15, %cst_14 {dimension_numbers = #tpu.dot_dimension_numbers<[1], [0], [0], [1], [0, 0, 1, 1], [], []>} : vector<8x128xf32>, vector<128x8xf32>, vector<8x8xf32> -> vector<8x8xf32>
    %c0_15 = arith.constant 0 : index
    %c0_16 = arith.constant 0 : index
    %17 = vector.load %arg7[%c0_15, %c0_16] : memref<1x8xf32, #tpu.memory_space<vmem>>, vector<1x8xf32>
    %18 = vector.broadcast %17 : vector<1x8xf32> to vector<8x8xf32>
    %19 = arith.addf %16, %18 : vector<8x8xf32>
    %c0_17 = arith.constant 0 : index
    %c0_18 = arith.constant 0 : index
    %20 = vector.load %arg8[%c0_17, %c0_18] : memref<8x8xf32, #tpu.memory_space<vmem>>, vector<8x8xf32>
    tpu.vector_store %arg8[%c0_17, %c0_18], %19 {strides = array<i32>} : memref<8x8xf32, #tpu.memory_space<vmem>>, vector<8x8xf32>,
    return
  }
  func.func @transform_0(%arg0: i32) -> (i32, i32) {
    %c0_i32 = arith.constant 0 : i32
    %c0_i32_0 = arith.constant 0 : i32
    return %arg0, %c0_i32 : i32, i32
  }
  func.func @transform_1(%arg0: i32) -> (i32, i32) {
    %c0_i32 = arith.constant 0 : i32
    %c0_i32_0 = arith.constant 0 : i32
    %c0_i32_1 = arith.constant 0 : i32
    return %c0_i32, %c0_i32_0 : i32, i32
  }
  func.func @transform_2(%arg0: i32) -> (i32, i32) {
    %c0_i32 = arith.constant 0 : i32
    %c0_i32_0 = arith.constant 0 : i32
    %c0_i32_1 = arith.constant 0 : i32
    return %c0_i32, %c0_i32_0 : i32, i32
  }
  func.func @transform_3(%arg0: i32) -> (i32, i32) {
    %c0_i32 = arith.constant 0 : i32
    %c0_i32_0 = arith.constant 0 : i32
    %c0_i32_1 = arith.constant 0 : i32
    return %c0_i32, %c0_i32_0 : i32, i32
  }
  func.func @transform_4(%arg0: i32) -> (i32, i32) {
    %c0_i32 = arith.constant 0 : i32
    %c0_i32_0 = arith.constant 0 : i32
    %c0_i32_1 = arith.constant 0 : i32
    return %c0_i32, %c0_i32_0 : i32, i32
  }
  func.func @transform_5(%arg0: i32) -> (i32, i32) {
    %c0_i32 = arith.constant 0 : i32
    %c0_i32_0 = arith.constant 0 : i32
    %c0_i32_1 = arith.constant 0 : i32
    return %c0_i32, %c0_i32_0 : i32, i32
  }
  func.func @transform_6(%arg0: i32) -> (i32, i32) {
    %c0_i32 = arith.constant 0 : i32
    %c0_i32_0 = arith.constant 0 : i32
    %c0_i32_1 = arith.constant 0 : i32
    return %c0_i32, %c0_i32_0 : i32, i32
  }
  func.func @transform_7(%arg0: i32) -> (i32, i32) {
    %c0_i32 = arith.constant 0 : i32
    %c0_i32_0 = arith.constant 0 : i32
    return %arg0, %c0_i32 : i32, i32
  }
}

</mosaic_0001>

<llo_original>
// kernel: qnetwork_forward.1
$region0: #{qnetwork_forward.1}
  #allocation0 [shape = 'u32[]', space=smem, size = 0x4, offset = 0x4, fixed_abs, tag = 'smem constant byte address 0x4 - core index']
  #allocation1 [shape = 'u32[144,128]{1,0:T(1,128)}', space=vmem, size = 0x12000, scoped, tag = 'internal scratch']
  %s0 = inlined_call_operand.vmem [shape: f32[8,8], index: 0, kind: input, shape index: {}]
  %s1 = inlined_call_operand.vmem [shape: f32[8,128], index: 1, kind: input, shape index: {}]
  %s2 = inlined_call_operand.vmem [shape: f32[1,128], index: 2, kind: input, shape index: {}]
  %s3 = inlined_call_operand.vmem [shape: f32[128,128], index: 3, kind: input, shape index: {}]
  %s4 = inlined_call_operand.vmem [shape: f32[1,128], index: 4, kind: input, shape index: {}]
  %s5 = inlined_call_operand.vmem [shape: f32[128,8], index: 5, kind: input, shape index: {}]
  %s6 = inlined_call_operand.vmem [shape: f32[1,8], index: 6, kind: input, shape index: {}]
  %s7 = inlined_call_operand.vmem [shape: f32[8,8], index: 7, kind: output, shape index: {}]
  %s8 = sld [smem:[#allocation0]]
  $region38: #{qnetwork_forward.1} parent=0
    _
  %s10 = ssub.s32 1, %s8
  %s11 = scalar_select 0, %s10, %s8
  // Predicated region
  $region2: #{qnetwork_forward.1} parent=0 // pred_check
    _
  $region3: #{qnetwork_forward.1} parent=0 // pred_check_branch
    %13 = sbr.rel (0) target = $region5
  $region4: #{qnetwork_forward.1} parent=0 // pred_region
    _
  $region5: #{qnetwork_forward.1} parent=0 // pred_fallthru
    _
  // Predicated region
  $region6: #{qnetwork_forward.1} parent=0 // pred_check
    _
  $region7: #{qnetwork_forward.1} parent=0 // pred_check_branch
    %15 = sbr.rel (0) target = $region9
  $region8: #{qnetwork_forward.1} parent=0 // pred_region
    _
  $region9: #{qnetwork_forward.1} parent=0 // pred_fallthru
    _
  // Predicated region
  $region10: #{qnetwork_forward.1} parent=0 // pred_check
    _
  $region11: #{qnetwork_forward.1} parent=0 // pred_check_branch
    %17 = sbr.rel (0) target = $region13
  $region12: #{qnetwork_forward.1} parent=0 // pred_region
    _
  $region13: #{qnetwork_forward.1} parent=0 // pred_fallthru
    _
  // Predicated region
  $region14: #{qnetwork_forward.1} parent=0 // pred_check
    _
  $region15: #{qnetwork_forward.1} parent=0 // pred_check_branch
    %19 = sbr.rel (0) target = $region17
  $region16: #{qnetwork_forward.1} parent=0 // pred_region
    _
  $region17: #{qnetwork_forward.1} parent=0 // pred_fallthru
    _
  // Predicated region
  $region18: #{qnetwork_forward.1} parent=0 // pred_check
    _
  $region19: #{qnetwork_forward.1} parent=0 // pred_check_branch
    %21 = sbr.rel (0) target = $region21
  $region20: #{qnetwork_forward.1} parent=0 // pred_region
    _
  $region21: #{qnetwork_forward.1} parent=0 // pred_fallthru
    _
  // Predicated region
  $region22: #{qnetwork_forward.1} parent=0 // pred_check
    _
  $region23: #{qnetwork_forward.1} parent=0 // pred_check_branch
    %23 = sbr.rel (0) target = $region25
  $region24: #{qnetwork_forward.1} parent=0 // pred_region
    _
  $region25: #{qnetwork_forward.1} parent=0 // pred_fallthru
    _
  // Predicated region
  $region26: #{qnetwork_forward.1} parent=0 // pred_check
    _
  $region27: #{qnetwork_forward.1} parent=0 // pred_check_branch
    %25 = sbr.rel (0) target = $region29
  $region28: #{qnetwork_forward.1} parent=0 // pred_region
    _
  $region29: #{qnetwork_forward.1} parent=0 // pred_fallthru
    _
  %v26 = vld [vmem:[%s0] sm:$0xff]
  %v27 = vld [vmem:[%s1] sm:$0xff]
  %v28 = vld [vmem:[%s2] sm:$0x1]
  %v30 = vlaneseq
  %v31 = vshrl.u32 %v30, 7
  %v32 = vsub.s32 0, %v31
  %v33 = vrot.slane %v28, %v32
  %vm35 = vcmask 64512
  %v37 = vsel %vm35, %v26, 0
  %39 = vmatprep.subr.mxu0 0.0
  %40 = vmatpush1.msra.mxu0 %v27
  %41 = vmatprep.subr.mxu0 0.0
  %42 = vmatpush1.msra.mxu0 0.0
  %43 = vmatprep.subr.mxu0 0.0
  %44 = vmatpush1.msra.mxu0 0.0
  %45 = vmatprep.subr.mxu0 0.0
  %46 = vmatpush1.msra.mxu0 0.0
  %47 = vmatprep.subr.mxu0 0.0
  %48 = vmatpush1.msra.mxu0 0.0
  %49 = vmatprep.subr.mxu0 0.0
  %50 = vmatpush1.msra.mxu0 0.0
  %51 = vmatprep.subr.mxu0 0.0
  %52 = vmatpush1.msra.mxu0 0.0
  %53 = vmatprep.subr.mxu0 0.0
  %54 = vmatpush1.msra.mxu0 0.0
  %55 = vmatprep.subr.mxu0 0.0
  %56 = vmatpush1.msra.mxu0 0.0
  %57 = vmatprep.subr.mxu0 0.0
  %58 = vmatpush1.msra.mxu0 0.0
  %59 = vmatprep.subr.mxu0 0.0
  %60 = vmatpush1.msra.mxu0 0.0
  %61 = vmatprep.subr.mxu0 0.0
  %62 = vmatpush1.msra.mxu0 0.0
  %63 = vmatprep.subr.mxu0 0.0
  %64 = vmatpush1.msra.mxu0 0.0
  %65 = vmatprep.subr.mxu0 0.0
  %66 = vmatpush1.msra.mxu0 0.0
  %67 = vmatprep.subr.mxu0 0.0
  %68 = vmatpush1.msra.mxu0 0.0
  %69 = vmatprep.subr.mxu0 0.0
  %70 = vmatpush1.msra.mxu0 0.0
  %71 = vmatprep.subr.mxu0 0.0
  %72 = vmatpush1.msra.mxu0 0.0
  %73 = vmatprep.subr.mxu0 0.0
  %74 = vmatpush1.msra.mxu0 0.0
  %75 = vmatprep.subr.mxu0 0.0
  %76 = vmatpush1.msra.mxu0 0.0
  %77 = vmatprep.subr.mxu0 0.0
  %78 = vmatpush1.msra.mxu0 0.0
  %79 = vmatprep.subr.mxu0 0.0
  %80 = vmatpush1.msra.mxu0 0.0
  %81 = vmatprep.subr.mxu0 0.0
  %82 = vmatpush1.msra.mxu0 0.0
  %83 = vmatprep.subr.mxu0 0.0
  %84 = vmatpush1.msra.mxu0 0.0
  %85 = vmatprep.subr.mxu0 0.0
  %86 = vmatpush1.msra.mxu0 0.0
  %87 = vmatprep.subr.mxu0 0.0
  %88 = vmatpush1.msra.mxu0 0.0
  %89 = vmatprep.subr.mxu0 0.0
  %90 = vmatpush1.msra.mxu0 0.0
  %91 = vmatprep.subr.mxu0 0.0
  %92 = vmatpush1.msra.mxu0 0.0
  %93 = vmatprep.subr.mxu0 0.0
  %94 = vmatpush1.msra.mxu0 0.0
  %95 = vmatprep.subr.mxu0 0.0
  %96 = vmatpush1.msra.mxu0 0.0
  %97 = vmatprep.subr.mxu0 0.0
  %98 = vmatpush1.msra.mxu0 0.0
  %99 = vmatprep.subr.mxu0 0.0
  %100 = vmatpush1.msra.mxu0 0.0
  %101 = vmatprep.subr.mxu0 0.0
  %102 = vmatpush1.msra.mxu0 0.0
  %103 = vmatprep.mubr.f32.mxu0 0.0
  %104 = vmatmul.mubr.f32.gmra.mrb[0].mxu0 %v37
  %v105 = vpop.f32.mrb[0].mxu0
  %v106 = vadd.f32 %v33, %v105
  %v107 = vpop.f32.mrb[0].mxu0
  %108 = vdwg.mxu0
  %v109 = vmax.f32 %v106, 0.0
  %v110 = vld [vmem:[%s3] sm:$0xff]
  %v111 = vld [vmem:[%s3 + $0x8] sm:$0xff]
  %v112 = vld [vmem:[%s3 + $0x10] sm:$0xff]
  %v113 = vld [vmem:[%s3 + $0x18] sm:$0xff]
  %v114 = vld [vmem:[%s3 + $0x20] sm:$0xff]
  %v115 = vld [vmem:[%s3 + $0x28] sm:$0xff]
  %v116 = vld [vmem:[%s3 + $0x30] sm:$0xff]
  %v117 = vld [vmem:[%s3 + $0x38] sm:$0xff]
  %v118 = vld [vmem:[%s3 + $0x40] sm:$0xff]
  %v119 = vld [vmem:[%s3 + $0x48] sm:$0xff]
  %v120 = vld [vmem:[%s3 + $0x50] sm:$0xff]
  %v121 = vld [vmem:[%s3 + $0x58] sm:$0xff]
  %v122 = vld [vmem:[%s3 + $0x60] sm:$0xff]
  %v123 = vld [vmem:[%s3 + $0x68] sm:$0xff]
  %v124 = vld [vmem:[%s3 + $0x70] sm:$0xff]
  %v125 = vld [vmem:[%s3 + $0x78] sm:$0xff]
  %v126 = vld [vmem:[%s4] sm:$0x1]
  %v128 = vlaneseq
  %v129 = vshrl.u32 %v128, 7
  %v130 = vsub.s32 0, %v129
  %v131 = vrot.slane %v126, %v130
  %133 = vmatprep.subr.mxu0 0.0
  %134 = vmatpush1.msra.mxu0 %v110
  %135 = vmatprep.subr.mxu0 0.0
  %136 = vmatpush1.msra.mxu0 %v111
  %137 = vmatprep.subr.mxu0 0.0
  %138 = vmatpush1.msra.mxu0 %v112
  %139 = vmatprep.subr.mxu0 0.0
  %140 = vmatpush1.msra.mxu0 %v113
  %141 = vmatprep.subr.mxu0 0.0
  %142 = vmatpush1.msra.mxu0 %v114
  %143 = vmatprep.subr.mxu0 0.0
  %144 = vmatpush1.msra.mxu0 %v115
  %145 = vmatprep.subr.mxu0 0.0
  %146 = vmatpush1.msra.mxu0 %v116
  %147 = vmatprep.subr.mxu0 0.0
  %148 = vmatpush1.msra.mxu0 %v117
  %149 = vmatprep.subr.mxu0 0.0
  %150 = vmatpush1.msra.mxu0 %v118
  %151 = vmatprep.subr.mxu0 0.0
  %152 = vmatpush1.msra.mxu0 %v119
  %153 = vmatprep.subr.mxu0 0.0
  %154 = vmatpush1.msra.mxu0 %v120
  %155 = vmatprep.subr.mxu0 0.0
  %156 = vmatpush1.msra.mxu0 %v121
  %157 = vmatprep.subr.mxu0 0.0
  %158 = vmatpush1.msra.mxu0 %v122
  %159 = vmatprep.subr.mxu0 0.0
  %160 = vmatpush1.msra.mxu0 %v123
  %161 = vmatprep.subr.mxu0 0.0
  %162 = vmatpush1.msra.mxu0 %v124
  %163 = vmatprep.subr.mxu0 0.0
  %164 = vmatpush1.msra.mxu0 %v125
  %165 = vmatprep.subr.mxu0 0.0
  %166 = vmatpush1.msra.mxu0 0.0
  %167 = vmatprep.subr.mxu0 0.0
  %168 = vmatpush1.msra.mxu0 0.0
  %169 = vmatprep.subr.mxu0 0.0
  %170 = vmatpush1.msra.mxu0 0.0
  %171 = vmatprep.subr.mxu0 0.0
  %172 = vmatpush1.msra.mxu0 0.0
  %173 = vmatprep.subr.mxu0 0.0
  %174 = vmatpush1.msra.mxu0 0.0
  %175 = vmatprep.subr.mxu0 0.0
  %176 = vmatpush1.msra.mxu0 0.0
  %177 = vmatprep.subr.mxu0 0.0
  %178 = vmatpush1.msra.mxu0 0.0
  %179 = vmatprep.subr.mxu0 0.0
  %180 = vmatpush1.msra.mxu0 0.0
  %181 = vmatprep.subr.mxu0 0.0
  %182 = vmatpush1.msra.mxu0 0.0
  %183 = vmatprep.subr.mxu0 0.0
  %184 = vmatpush1.msra.mxu0 0.0
  %185 = vmatprep.subr.mxu0 0.0
  %186 = vmatpush1.msra.mxu0 0.0
  %187 = vmatprep.subr.mxu0 0.0
  %188 = vmatpush1.msra.mxu0 0.0
  %189 = vmatprep.subr.mxu0 0.0
  %190 = vmatpush1.msra.mxu0 0.0
  %191 = vmatprep.subr.mxu0 0.0
  %192 = vmatpush1.msra.mxu0 0.0
  %193 = vmatprep.subr.mxu0 0.0
  %194 = vmatpush1.msra.mxu0 0.0
  %195 = vmatprep.subr.mxu0 0.0
  %196 = vmatpush1.msra.mxu0 0.0
  %197 = vmatprep.mubr.f32.mxu0 0.0
  %198 = vmatmul.mubr.f32.gmra.mrb[0].mxu0 %v109
  %v199 = vpop.f32.mrb[0].mxu0
  %v200 = vadd.f32 %v131, %v199
  %v201 = vpop.f32.mrb[0].mxu0
  %202 = vdwg.mxu0
  %v203 = vmax.f32 %v200, 0.0
  %v204 = vld [vmem:[%s5] sm:$0xff]
  %v205 = vld [vmem:[%s5 + $0x8] sm:$0xff]
  %v206 = vld [vmem:[%s5 + $0x10] sm:$0xff]
  %v207 = vld [vmem:[%s5 + $0x18] sm:$0xff]
  %v208 = vld [vmem:[%s5 + $0x20] sm:$0xff]
  %v209 = vld [vmem:[%s5 + $0x28] sm:$0xff]
  %v210 = vld [vmem:[%s5 + $0x30] sm:$0xff]
  %v211 = vld [vmem:[%s5 + $0x38] sm:$0xff]
  %v212 = vld [vmem:[%s5 + $0x40] sm:$0xff]
  %v213 = vld [vmem:[%s5 + $0x48] sm:$0xff]
  %v214 = vld [vmem:[%s5 + $0x50] sm:$0xff]
  %v215 = vld [vmem:[%s5 + $0x58] sm:$0xff]
  %v216 = vld [vmem:[%s5 + $0x60] sm:$0xff]
  %v217 = vld [vmem:[%s5 + $0x68] sm:$0xff]
  %v218 = vld [vmem:[%s5 + $0x70] sm:$0xff]
  %v219 = vld [vmem:[%s5 + $0x78] sm:$0xff]
  %v220 = vld [vmem:[%s6] sm:$0x1]
  %v222 = vlaneseq
  %v223 = vshrl.u32 %v222, 7
  %v224 = vsub.s32 0, %v223
  %v225 = vrot.slane %v220, %v224
  %227 = vmatprep.subr.mxu0 0.0
  %228 = vmatpush1.msra.mxu0 %v204
  %229 = vmatprep.subr.mxu0 0.0
  %230 = vmatpush1.msra.mxu0 %v205
  %231 = vmatprep.subr.mxu0 0.0
  %232 = vmatpush1.msra.mxu0 %v206
  %233 = vmatprep.subr.mxu0 0.0
  %234 = vmatpush1.msra.mxu0 %v207
  %235 = vmatprep.subr.mxu0 0.0
  %236 = vmatpush1.msra.mxu0 %v208
  %237 = vmatprep.subr.mxu0 0.0
  %238 = vmatpush1.msra.mxu0 %v209
  %239 = vmatprep.subr.mxu0 0.0
  %240 = vmatpush1.msra.mxu0 %v210
  %241 = vmatprep.subr.mxu0 0.0
  %242 = vmatpush1.msra.mxu0 %v211
  %243 = vmatprep.subr.mxu0 0.0
  %244 = vmatpush1.msra.mxu0 %v212
  %245 = vmatprep.subr.mxu0 0.0
  %246 = vmatpush1.msra.mxu0 %v213
  %247 = vmatprep.subr.mxu0 0.0
  %248 = vmatpush1.msra.mxu0 %v214
  %249 = vmatprep.subr.mxu0 0.0
  %250 = vmatpush1.msra.mxu0 %v215
  %251 = vmatprep.subr.mxu0 0.0
  %252 = vmatpush1.msra.mxu0 %v216
  %253 = vmatprep.subr.mxu0 0.0
  %254 = vmatpush1.msra.mxu0 %v217
  %255 = vmatprep.subr.mxu0 0.0
  %256 = vmatpush1.msra.mxu0 %v218
  %257 = vmatprep.subr.mxu0 0.0
  %258 = vmatpush1.msra.mxu0 %v219
  %259 = vmatprep.subr.mxu0 0.0
  %260 = vmatpush1.msra.mxu0 0.0
  %261 = vmatprep.subr.mxu0 0.0
  %262 = vmatpush1.msra.mxu0 0.0
  %263 = vmatprep.subr.mxu0 0.0
  %264 = vmatpush1.msra.mxu0 0.0
  %265 = vmatprep.subr.mxu0 0.0
  %266 = vmatpush1.msra.mxu0 0.0
  %267 = vmatprep.subr.mxu0 0.0
  %268 = vmatpush1.msra.mxu0 0.0
  %269 = vmatprep.subr.mxu0 0.0
  %270 = vmatpush1.msra.mxu0 0.0
  %271 = vmatprep.subr.mxu0 0.0
  %272 = vmatpush1.msra.mxu0 0.0
  %273 = vmatprep.subr.mxu0 0.0
  %274 = vmatpush1.msra.mxu0 0.0
  %275 = vmatprep.subr.mxu0 0.0
  %276 = vmatpush1.msra.mxu0 0.0
  %277 = vmatprep.subr.mxu0 0.0
  %278 = vmatpush1.msra.mxu0 0.0
  %279 = vmatprep.subr.mxu0 0.0
  %280 = vmatpush1.msra.mxu0 0.0
  %281 = vmatprep.subr.mxu0 0.0
  %282 = vmatpush1.msra.mxu0 0.0
  %283 = vmatprep.subr.mxu0 0.0
  %284 = vmatpush1.msra.mxu0 0.0
  %285 = vmatprep.subr.mxu0 0.0
  %286 = vmatpush1.msra.mxu0 0.0
  %287 = vmatprep.subr.mxu0 0.0
  %288 = vmatpush1.msra.mxu0 0.0
  %289 = vmatprep.subr.mxu0 0.0
  %290 = vmatpush1.msra.mxu0 0.0
  %291 = vmatprep.mubr.f32.mxu0 0.0
  %292 = vmatmul.mubr.f32.gmra.mrb[0].mxu0 %v203
  %v293 = vpop.f32.mrb[0].mxu0
  %v294 = vadd.f32 %v225, %v293
  %v295 = vpop.f32.mrb[0].mxu0
  %296 = vdwg.mxu0
  %297 = vst.msk [vmem:[%s7] sm:$0xff] %vm35, %v294
  // Predicated region
  $region30: #{qnetwork_forward.1} parent=0 // pred_check
    _
  $region31: #{qnetwork_forward.1} parent=0 // pred_check_branch
    %299 = sbr.rel (0) target = $region33
  $region32: #{qnetwork_forward.1} parent=0 // pred_region
    _
  $region33: #{qnetwork_forward.1} parent=0 // pred_fallthru
    _
  // Predicated region
  $region34: #{qnetwork_forward.1} parent=0 // pred_check
    _
  $region35: #{qnetwork_forward.1} parent=0 // pred_check_branch
    %301 = sbr.rel (0) target = $region37
  $region36: #{qnetwork_forward.1} parent=0 // pred_region
    _
  $region37: #{qnetwork_forward.1} parent=0 // pred_fallthru
    _

</llo_original>
